<compile_context>
chip_gen: v6e
topology: v6e:2x2x1
jax: 0.10.0
libtpu: 0.0.40
codegen_flags: <defaults>
</compile_context>

<pallas_src>
import functools

import jax
import jax.numpy as jnp
from jax import lax
from jax.experimental import pallas as pl
from jax.experimental.pallas import tpu as pltpu


def _round_up(x, m):
    return ((x + m - 1) // m) * m


def _cdiv(a, b):
    return -(-a // b)


def _choose_row_tiles(n, target=512):
    """Balanced row tiling: TN*nt covers n with at most 15 rows of pad."""
    nt = max(1, _cdiv(n, target))
    if nt == 1 and n >= 64:
        nt = 2                      # v7x: give both TensorCores a tile
    tn = _round_up(_cdiv(n, nt), 16)  # 16 ⇒ valid sublane tiling for f32 & bf16
    nt = _cdiv(n, tn)
    return tn, nt


def _pair_classifier_kernel(ids_ref, pars_ref, w1p_ref, w1c_ref, b1_ref,
                            w2_ref, b2_ref, scores_ref, *, tile_rows):
    # ids_ref    : (TN, 1)   int32   previous-paragraph index per row (this tile)
    # pars_ref   : (Np, H)   f32     ALL paragraphs, VMEM-resident (constant index_map)
    # w1p_ref    : (H,  D)   bf16    W1 rows multiplying the `prev` half of the concat
    # w1c_ref    : (H,  D)   bf16    W1 rows multiplying the `cur` half
    # b1_ref     : (1,  D)   f32
    # w2_ref     : (D,  Op)  bf16    padded label columns are zero
    # b2_ref     : (1,  Op)  f32     padded label lanes pre-filled with -1e30
    # scores_ref : (TN, Op)  bf16    lane-dense output, only [:, :O] real
    i = pl.program_id(0)
    row0 = pl.multiple_of(i * tile_rows, tile_rows)

    np_rows = pars_ref.shape[0]
    pars_bf = pars_ref[...].astype(jnp.bfloat16)                      # (Np, H)
    cur = pars_ref[pl.ds(row0, tile_rows), :].astype(jnp.bfloat16)    # (TN, H)

    # In-kernel row gather of the "previous" paragraphs via a one-hot MXU matmul:
    # prev[r, :] = paragraphs[previous_ids[r], :]
    ids = ids_ref[...]                                                # (TN, 1) int32
    col = lax.broadcasted_iota(jnp.int32, (tile_rows, np_rows), 1)
    onehot = jnp.where(col == ids, 1.0, 0.0).astype(jnp.bfloat16)     # (TN, Np)
    prev = jnp.dot(onehot, pars_bf, preferred_element_type=jnp.float32)

    # Fused concat:  [prev, cur] @ W1 == prev @ W1[:H] + cur @ W1[H:]
    h = (jnp.dot(prev.astype(jnp.bfloat16), w1p_ref[...],
                 preferred_element_type=jnp.float32)
         + jnp.dot(cur, w1c_ref[...], preferred_element_type=jnp.float32)
         + b1_ref[...])
    h = jnp.maximum(h, 0.0)

    # Padded label lanes get logit = 0 (zero W2 cols) + (-1e30 bias) -> exp() == 0,
    # so no extra lane mask is needed here.
    logits = (jnp.dot(h.astype(jnp.bfloat16), w2_ref[...],
                      preferred_element_type=jnp.float32)
              + b2_ref[...])

    # Numerically stable row-wise softmax; reciprocal goes to the EUP slot.
    m = jnp.max(logits, axis=-1, keepdims=True)
    e = jnp.exp(logits - m)
    denom = jnp.sum(e, axis=-1, keepdims=True)
    scores_ref[...] = (e * pl.reciprocal(denom, approx=True)).astype(scores_ref.dtype)


def prepare_pair_classifier_params(params, hidden_dim):
    """One-time weight prep (split/cast/pad).  Call once, reuse every forward."""
    w1, b1, w2, b2 = params
    H = hidden_dim
    D = w1.shape[1]
    O = w2.shape[1]
    Op = _round_up(max(O, 1), 128)                 # lane-dense output stores

    w1p = w1[:H, :].astype(jnp.bfloat16)           # multiplies the `prev` half
    w1c = w1[H:, :].astype(jnp.bfloat16)           # multiplies the `cur` half
    b1p = b1.reshape(1, D).astype(jnp.float32)
    w2p = jnp.pad(w2, ((0, 0), (0, Op - O))).astype(jnp.bfloat16)
    b2p = jnp.concatenate(
        [b2.reshape(1, O).astype(jnp.float32),
         jnp.full((1, Op - O), -1e30, jnp.float32)], axis=1)
    return dict(w1p=w1p, w1c=w1c, b1=b1p, w2=w2p, b2=b2p, H=H, D=D, O=O, Op=Op)


def _pair_classifier_pallas(pars, ids, prepared):
    """pars: (N, H) f32, ids: (N,) int32.  Returns softmax scores (N, O) f32."""
    N, H = pars.shape
    D, O, Op = prepared["D"], prepared["O"], prepared["Op"]

    TN, nt = _choose_row_tiles(N)
    Np = TN * nt
    if Np != N:                                    # row-only pad (no lane pad, no cast)
        pars = jnp.pad(pars, ((0, Np - N), (0, 0)))
        ids = jnp.pad(ids, (0, Np - N))
    ids2 = ids.reshape(Np, 1).astype(jnp.int32)

    # VMEM budget -> explicit limit (v5e default scoped 16 MiB; v7x physical 64 MiB).
    bytes_resident = (Np * H * 4                   # paragraphs (f32, resident)
                      + 2 * H * D * 2              # split W1 (bf16)
                      + D * Op * 2                 # W2 (bf16)
                      + (D + Op) * 4)              # biases (f32)
    bytes_streamed = TN * 4 + TN * Op * 2          # ids tile + output tile
    bytes_scratch = (TN * Np * 2                   # one-hot gather matrix (bf16)
                     + Np * H * 2                  # bf16 copy of paragraphs
                     + 2 * TN * D * 4              # hidden activations (f32)
                     + 3 * TN * Op * 4)            # logits / exp / scores (f32)
    est = 2 * (bytes_resident + bytes_streamed) + bytes_scratch + (4 << 20)
    vmem_limit = int(min(56 << 20, max(24 << 20, est)))

    row_spec = lambda s: pl.BlockSpec(s, lambda i: (i, 0))   # tiled over N
    fix_spec = lambda s: pl.BlockSpec(s, lambda i: (0, 0))   # resident (DMA'd once)

    scores = pl.pallas_call(
        functools.partial(_pair_classifier_kernel, tile_rows=TN),
        grid=(nt,),
        in_specs=[
            row_spec((TN, 1)),      # previous_ids tile
            fix_spec((Np, H)),      # paragraphs, resident, unpadded last dim
            fix_spec((H, D)),       # W1_prev
            fix_spec((H, D)),       # W1_cur
            fix_spec((1, D)),       # b1
            fix_spec((D, Op)),      # W2
            fix_spec((1, Op)),      # b2
        ],
        out_specs=row_spec((TN, Op)),
        out_shape=jax.ShapeDtypeStruct((Np, Op), jnp.bfloat16),
        compiler_params=pltpu.CompilerParams(
            dimension_semantics=("parallel",),
            vmem_limit_bytes=vmem_limit),
    )(ids2, pars, prepared["w1p"], prepared["w1c"], prepared["b1"],
      prepared["w2"], prepared["b2"])

    return scores[:N, :O].astype(jnp.float32)


def pair_classifier_forward(paragraphs, previous_ids, prepared):
    """
    paragraphs:   (1, N, H) float32
    previous_ids: (1, N)    int32   (index of the previous same-level paragraph)
    prepared:     output of prepare_pair_classifier_params (one-time weight prep)
    returns (previous_relation_scores (1, N-1, O), loss=None)
    """
    _, N, H = paragraphs.shape
    O = prepared["O"]

    scores = _pair_classifier_pallas(paragraphs[0], previous_ids[0], prepared)
    scores = scores.reshape(1, N, O)
    # softmax(all rows)[:, 1:, :] == softmax(logits[:, 1:, :]) since softmax is row-wise
    previous_relation_scores = scores[:, 1:, :]
    loss = None  # golden=None path; CrossEntropyLoss branch not needed for forward
    return previous_relation_scores, loss


def make_params(key, input_dims, output_dims):
    k1, k2, k3, k4 = jax.random.split(key, 4)
    scale1 = 1.0 / jnp.sqrt(input_dims)
    w1 = jax.random.uniform(k1, (input_dims, input_dims), jnp.float32, -scale1, scale1)
    b1 = jax.random.uniform(k2, (1, input_dims), jnp.float32, -scale1, scale1)
    w2 = jax.random.uniform(k3, (input_dims, output_dims), jnp.float32, -scale1, scale1)
    b2 = jax.random.uniform(k4, (1, output_dims), jnp.float32, -scale1, scale1)
    return w1, b1, w2, b2


def _reference_forward(paragraphs, previous_ids, params):
    """Pure-JAX f32 reference of the PyTorch forward (golden=None)."""
    w1, b1, w2, b2 = params
    prev = paragraphs[:, previous_ids[0], :]
    x = jnp.concatenate([prev, paragraphs], axis=-1)
    h = jnp.maximum(jnp.einsum("bnd,de->bne", x, w1) + b1, 0.0)
    logits = jnp.einsum("bnd,do->bno", h, w2) + b2
    return jax.nn.softmax(logits[:, 1:, :], axis=-1)


if __name__ == "__main__":
    key = jax.random.PRNGKey(0)
    k_par, k_prm = jax.random.split(key)

    batch = 1            # squeeze(0) gather in the module implies batch == 1
    num_paragraphs = 8
    hidden = 16          # per-paragraph hidden dim
    input_dims = 2 * hidden
    output_dims = 3      # ["Continue", "Break", "Combine"]

    paragraphs = jax.random.normal(k_par, (batch, num_paragraphs, hidden), jnp.float32)
    # previous paragraph index: paragraph i points at paragraph i-1 (0 for the first)
    previous_ids = jnp.concatenate(
        [jnp.zeros((batch, 1), jnp.int32),
         jnp.arange(num_paragraphs - 1, dtype=jnp.int32)[None, :]], axis=1)

    params = make_params(k_prm, input_dims, output_dims)
    prepared = prepare_pair_classifier_params(params, hidden)   # one-time weight prep

    scores, loss = pair_classifier_forward(paragraphs, previous_ids, prepared)
    scores = jax.block_until_ready(scores)

    ref = _reference_forward(paragraphs, previous_ids, params)

    assert scores.shape == (batch, num_paragraphs - 1, output_dims)
    assert loss is None
    assert jnp.allclose(jnp.sum(scores, axis=-1), 1.0, atol=2e-2)
    assert jnp.allclose(scores, ref, atol=2e-2), float(jnp.max(jnp.abs(scores - ref)))
    print("KERNEL_OK")
</pallas_src>

<mosaic_0001>
module attributes {stable_mosaic.version = 11 : i64} {
  func.func @_pair_classifier_kernel(%arg0: i32, %arg1: memref<16x1xi32, #tpu.memory_space<vmem>>, %arg2: memref<16x16xf32, #tpu.memory_space<vmem>>, %arg3: memref<16x32xbf16, #tpu.memory_space<vmem>>, %arg4: memref<16x32xbf16, #tpu.memory_space<vmem>>, %arg5: memref<1x32xf32, #tpu.memory_space<vmem>>, %arg6: memref<32x128xbf16, #tpu.memory_space<vmem>>, %arg7: memref<1x128xf32, #tpu.memory_space<vmem>>, %arg8: memref<16x128xbf16, #tpu.memory_space<vmem>>) attributes {dimension_semantics = [#tpu.dimension_semantics<parallel>], iteration_bounds = array<i64: 1>, scalar_prefetch = 0 : i64, scratch_operands = 0 : i64, tpu.core_type = #tpu.core_type<tc>, window_params = [{transform_indices = @transform_0, window_bounds = array<i64: 16, 1>}, {pipeline_mode = #tpu.pipeline_mode<synchronous>, transform_indices = @transform_1, window_bounds = array<i64: 16, 16>}, {pipeline_mode = #tpu.pipeline_mode<synchronous>, transform_indices = @transform_2, window_bounds = array<i64: 16, 32>}, {pipeline_mode = #tpu.pipeline_mode<synchronous>, transform_indices = @transform_3, window_bounds = array<i64: 16, 32>}, {pipeline_mode = #tpu.pipeline_mode<synchronous>, transform_indices = @transform_4, window_bounds = array<i64: 1, 32>}, {pipeline_mode = #tpu.pipeline_mode<synchronous>, transform_indices = @transform_5, window_bounds = array<i64: 32, 128>}, {pipeline_mode = #tpu.pipeline_mode<synchronous>, transform_indices = @transform_6, window_bounds = array<i64: 1, 128>}, {transform_indices = @transform_7, window_bounds = array<i64: 16, 128>}]} {
    %c16_i32 = arith.constant 16 : i32
    %0 = arith.muli %arg0, %c16_i32 : i32
    %1 = tpu.assume_multiple %0, 16 : i32
    %c0 = arith.constant 0 : index
    %c0_0 = arith.constant 0 : index
    %2 = vector.load %arg2[%c0, %c0_0] : memref<16x16xf32, #tpu.memory_space<vmem>>, vector<16x16xf32>
    %3 = arith.truncf %2 : vector<16x16xf32> to vector<16x16xbf16>
    %4 = arith.index_cast %1 : i32 to index
    %c0_1 = arith.constant 0 : index
    %5 = vector.load %arg2[%4, %c0_1] : memref<16x16xf32, #tpu.memory_space<vmem>>, vector<16x16xf32>
    %6 = arith.truncf %5 : vector<16x16xf32> to vector<16x16xbf16>
    %c0_2 = arith.constant 0 : index
    %c0_3 = arith.constant 0 : index
    %7 = vector.load %arg1[%c0_2, %c0_3] : memref<16x1xi32, #tpu.memory_space<vmem>>, vector<16x1xi32>
    %8 = tpu.iota {dimensions = array<i32: 1>} : vector<16x16xi32>
    %9 = vector.broadcast %7 : vector<16x1xi32> to vector<16x16xi32>
    %10 = arith.cmpi eq, %8, %9 : vector<16x16xi32>
    %cst = arith.constant 1.000000e+00 : f32
    %cst_4 = arith.constant 0.000000e+00 : f32
    %11 = vector.broadcast %cst : f32 to vector<16x16xf32>
    %12 = vector.broadcast %cst_4 : f32 to vector<16x16xf32>
    %13 = arith.select %10, %11, %12 : vector<16x16xi1>, vector<16x16xf32>
    %14 = arith.truncf %13 : vector<16x16xf32> to vector<16x16xbf16>
    %cst_5 = arith.constant dense<0.000000e+00> : vector<16x16xf32>
    %15 = tpu.matmul %14, %3, %cst_5 {dimension_numbers = #tpu.dot_dimension_numbers<[1], [0], [0], [1], [0, 0, 1, 1], [], []>} : vector<16x16xbf16>, vector<16x16xbf16>, vector<16x16xf32> -> vector<16x16xf32>
    %16 = arith.truncf %15 : vector<16x16xf32> to vector<16x16xbf16>
    %c0_6 = arith.constant 0 : index
    %c0_7 = arith.constant 0 : index
    %17 = vector.load %arg3[%c0_6, %c0_7] : memref<16x32xbf16, #tpu.memory_space<vmem>>, vector<16x32xbf16>
    %cst_8 = arith.constant dense<0.000000e+00> : vector<16x32xf32>
    %18 = tpu.matmul %16, %17, %cst_8 {dimension_numbers = #tpu.dot_dimension_numbers<[1], [0], [0], [1], [0, 0, 1, 1], [], []>} : vector<16x16xbf16>, vector<16x32xbf16>, vector<16x32xf32> -> vector<16x32xf32>
    %c0_9 = arith.constant 0 : index
    %c0_10 = arith.constant 0 : index
    %19 = vector.load %arg4[%c0_9, %c0_10] : memref<16x32xbf16, #tpu.memory_space<vmem>>, vector<16x32xbf16>
    %cst_11 = arith.constant dense<0.000000e+00> : vector<16x32xf32>
    %20 = tpu.matmul %6, %19, %cst_11 {dimension_numbers = #tpu.dot_dimension_numbers<[1], [0], [0], [1], [0, 0, 1, 1], [], []>} : vector<16x16xbf16>, vector<16x32xbf16>, vector<16x32xf32> -> vector<16x32xf32>
    %21 = arith.addf %18, %20 : vector<16x32xf32>
    %c0_12 = arith.constant 0 : index
    %c0_13 = arith.constant 0 : index
    %22 = vector.load %arg5[%c0_12, %c0_13] : memref<1x32xf32, #tpu.memory_space<vmem>>, vector<1x32xf32>
    %23 = vector.broadcast %22 : vector<1x32xf32> to vector<16x32xf32>
    %24 = arith.addf %21, %23 : vector<16x32xf32>
    %cst_14 = arith.constant 0.000000e+00 : f32
    %25 = vector.broadcast %cst_14 : f32 to vector<16x32xf32>
    %26 = arith.maximumf %24, %25 : vector<16x32xf32>
    %27 = arith.truncf %26 : vector<16x32xf32> to vector<16x32xbf16>
    %c0_15 = arith.constant 0 : index
    %c0_16 = arith.constant 0 : index
    %28 = vector.load %arg6[%c0_15, %c0_16] : memref<32x128xbf16, #tpu.memory_space<vmem>>, vector<32x128xbf16>
    %cst_17 = arith.constant dense<0.000000e+00> : vector<16x128xf32>
    %29 = tpu.matmul %27, %28, %cst_17 {dimension_numbers = #tpu.dot_dimension_numbers<[1], [0], [0], [1], [0, 0, 1, 1], [], []>} : vector<16x32xbf16>, vector<32x128xbf16>, vector<16x128xf32> -> vector<16x128xf32>
    %c0_18 = arith.constant 0 : index
    %c0_19 = arith.constant 0 : index
    %30 = vector.load %arg7[%c0_18, %c0_19] : memref<1x128xf32, #tpu.memory_space<vmem>>, vector<1x128xf32>
    %31 = vector.broadcast %30 : vector<1x128xf32> to vector<16x128xf32>
    %32 = arith.addf %29, %31 : vector<16x128xf32>
    %cst_20 = arith.constant dense<0xFF800000> : vector<16xf32>
    %33 = vector.multi_reduction <maximumf>, %32, %cst_20 [1] : vector<16x128xf32> to vector<16xf32>
    %34 = vector.shape_cast %33 : vector<16xf32> to vector<16x1xf32>
    %35 = vector.broadcast %34 : vector<16x1xf32> to vector<16x128xf32>
    %36 = arith.subf %32, %35 : vector<16x128xf32>
    %37 = math.exp %36 : vector<16x128xf32>
    %cst_21 = arith.constant dense<0.000000e+00> : vector<16xf32>
    %38 = vector.multi_reduction <add>, %37, %cst_21 [1] : vector<16x128xf32> to vector<16xf32>
    %39 = vector.shape_cast %38 : vector<16xf32> to vector<16x1xf32>
    %40 = tpu.reciprocal %39 {approx = true} : vector<16x1xf32> -> vector<16x1xf32>
    %41 = vector.broadcast %40 : vector<16x1xf32> to vector<16x128xf32>
    %42 = arith.mulf %37, %41 : vector<16x128xf32>
    %43 = arith.truncf %42 : vector<16x128xf32> to vector<16x128xbf16>
    %c0_22 = arith.constant 0 : index
    %c0_23 = arith.constant 0 : index
    %44 = vector.load %arg8[%c0_22, %c0_23] : memref<16x128xbf16, #tpu.memory_space<vmem>>, vector<16x128xbf16>
    tpu.vector_store %arg8[%c0_22, %c0_23], %43 {strides = array<i32>} : memref<16x128xbf16, #tpu.memory_space<vmem>>, vector<16x128xbf16>,
    return
  }
  func.func @transform_0(%arg0: i32) -> (i32, i32) {
    %c0_i32 = arith.constant 0 : i32
    %c0_i32_0 = arith.constant 0 : i32
    return %arg0, %c0_i32 : i32, i32
  }
  func.func @transform_1(%arg0: i32) -> (i32, i32) {
    %c0_i32 = arith.constant 0 : i32
    %c0_i32_0 = arith.constant 0 : i32
    %c0_i32_1 = arith.constant 0 : i32
    return %c0_i32, %c0_i32_0 : i32, i32
  }
  func.func @transform_2(%arg0: i32) -> (i32, i32) {
    %c0_i32 = arith.constant 0 : i32
    %c0_i32_0 = arith.constant 0 : i32
    %c0_i32_1 = arith.constant 0 : i32
    return %c0_i32, %c0_i32_0 : i32, i32
  }
  func.func @transform_3(%arg0: i32) -> (i32, i32) {
    %c0_i32 = arith.constant 0 : i32
    %c0_i32_0 = arith.constant 0 : i32
    %c0_i32_1 = arith.constant 0 : i32
    return %c0_i32, %c0_i32_0 : i32, i32
  }
  func.func @transform_4(%arg0: i32) -> (i32, i32) {
    %c0_i32 = arith.constant 0 : i32
    %c0_i32_0 = arith.constant 0 : i32
    %c0_i32_1 = arith.constant 0 : i32
    return %c0_i32, %c0_i32_0 : i32, i32
  }
  func.func @transform_5(%arg0: i32) -> (i32, i32) {
    %c0_i32 = arith.constant 0 : i32
    %c0_i32_0 = arith.constant 0 : i32
    %c0_i32_1 = arith.constant 0 : i32
    return %c0_i32, %c0_i32_0 : i32, i32
  }
  func.func @transform_6(%arg0: i32) -> (i32, i32) {
    %c0_i32 = arith.constant 0 : i32
    %c0_i32_0 = arith.constant 0 : i32
    %c0_i32_1 = arith.constant 0 : i32
    return %c0_i32, %c0_i32_0 : i32, i32
  }
  func.func @transform_7(%arg0: i32) -> (i32, i32) {
    %c0_i32 = arith.constant 0 : i32
    %c0_i32_0 = arith.constant 0 : i32
    return %arg0, %c0_i32 : i32, i32
  }
}

</mosaic_0001>

<llo_original>
// kernel: tpu_custom_call.1
$region0: #{tpu_custom_call.1}
  #allocation0 [shape = 'u32[]', space=smem, size = 0x4, offset = 0x4, fixed_abs, tag = 'smem constant byte address 0x4 - core index']
  #allocation1 [shape = 'u32[144,128]{1,0:T(1,128)}', space=vmem, size = 0x12000, scoped, tag = 'internal scratch']
  %s0 = inlined_call_operand.vmem [shape: s32[16,1], index: 0, kind: input, shape index: {}]
  %s1 = inlined_call_operand.vmem [shape: f32[16,16], index: 1, kind: input, shape index: {}]
  %s2 = inlined_call_operand.hbm [shape: bf16[16,32], index: 2, kind: input, shape index: {}]
  %s3 = inlined_call_operand.hbm [shape: bf16[16,32], index: 3, kind: input, shape index: {}]
  %s4 = inlined_call_operand.vmem [shape: f32[1,32], index: 4, kind: input, shape index: {}]
  %s5 = inlined_call_operand.hbm [shape: bf16[32,128], index: 5, kind: input, shape index: {}]
  %s6 = inlined_call_operand.vmem [shape: f32[1,128], index: 6, kind: input, shape index: {}]
  %s7 = inlined_call_operand.hbm [shape: bf16[16,128], index: 7, kind: output, shape index: {}]
  %s8 = sld [smem:[#allocation0]]
  $region50: #{tpu_custom_call.1} parent=0
    _
  %s10 = ssub.s32 1, %s8
  %s11 = scalar_select 0, %s10, %s8
  $region1: #{tpu_custom_call.1} parent=0
    #allocation2 [shape = 'u8[4096]{0}', space=vmem, size = 0x1000, scoped, tag = 'input window, operand 2, single buffered']
    #allocation3 [shape = 's32[1]{0}', space=sflag, size = 0x4, scoped, tag = 'scoped memory for tpu_custom_call.1']
    #allocation4 [shape = 's32[1]{0}', space=sflag, size = 0x4, scoped, tag = 'scoped memory for tpu_custom_call.1']
    #allocation5 [shape = 'u8[4096]{0}', space=vmem, size = 0x1000, scoped, tag = 'input window, operand 3, single buffered']
    #allocation6 [shape = 's32[1]{0}', space=sflag, size = 0x4, scoped, tag = 'scoped memory for tpu_custom_call.1']
    #allocation7 [shape = 'u8[8192]{0}', space=vmem, size = 0x2000, scoped, tag = 'input window, operand 5, single buffered']
    #allocation8 [shape = 'u8[4096]{0}', space=vmem, size = 0x1000, scoped, tag = 'output window, operand 0, single buffered']
    %12 = vsyncpa [#allocation3], 0
    %13 = vsyncpa [#allocation6], 0
    %14 = vsyncpa [#allocation4], 0
    // Predicated region
    $region2: #{tpu_custom_call.1} parent=1 // pred_check
      _
    $region3: #{tpu_custom_call.1} parent=1 // pred_check_branch
      %16 = sbr.rel (0) target = $region5
    $region4: #{tpu_custom_call.1} parent=1 // pred_region
      _
    $region5: #{tpu_custom_call.1} parent=1 // pred_fallthru
      _
    // Predicated region
    $region6: #{tpu_custom_call.1} parent=1 // pred_check
      _
    $region7: #{tpu_custom_call.1} parent=1 // pred_check_branch
      %18 = sbr.rel (0) target = $region9
    $region8: #{tpu_custom_call.1} parent=1 // pred_region
      _
    $region9: #{tpu_custom_call.1} parent=1 // pred_fallthru
      _
    // Predicated region
    $region10: #{tpu_custom_call.1} parent=1 // pred_check
      _
    $region11: #{tpu_custom_call.1} parent=1 // pred_check_branch
      %20 = sbr.rel (0) target = $region13
    $region12: #{tpu_custom_call.1} parent=1 // pred_region
      %s22 = ssub.s32 128, 128
      %23 = vsyncadd [#allocation3], %s22
      %s24 = sshll.u32 [#allocation2], 4
      %s25 = int_to_ptr.vmem [resolvable:$true] %s24
      %30 = dma.hbm_to_vmem [thread:$0]  %s2, 128, %s25, [#allocation3], 64, 64, 4
    $region13: #{tpu_custom_call.1} parent=1 // pred_fallthru
      _
    // Predicated region
    $region14: #{tpu_custom_call.1} parent=1 // pred_check
      _
    $region15: #{tpu_custom_call.1} parent=1 // pred_check_branch
      %32 = sbr.rel (0) target = $region17
    $region16: #{tpu_custom_call.1} parent=1 // pred_region
      %s34 = ssub.s32 128, 128
      %35 = vsyncadd [#allocation6], %s34
      %s36 = sshll.u32 [#allocation5], 4
      %s37 = int_to_ptr.vmem [resolvable:$true] %s36
      %42 = dma.hbm_to_vmem [thread:$0]  %s3, 128, %s37, [#allocation6], 64, 64, 4
    $region17: #{tpu_custom_call.1} parent=1 // pred_fallthru
      _
    // Predicated region
    $region18: #{tpu_custom_call.1} parent=1 // pred_check
      _
    $region19: #{tpu_custom_call.1} parent=1 // pred_check_branch
      %44 = sbr.rel (0) target = $region21
    $region20: #{tpu_custom_call.1} parent=1 // pred_region
      _
    $region21: #{tpu_custom_call.1} parent=1 // pred_fallthru
      _
    // Predicated region
    $region22: #{tpu_custom_call.1} parent=1 // pred_check
      _
    $region23: #{tpu_custom_call.1} parent=1 // pred_check_branch
      %46 = sbr.rel (0) target = $region25
    $region24: #{tpu_custom_call.1} parent=1 // pred_region
      %s48 = ssub.s32 256, 256
      %49 = vsyncadd [#allocation6], %s48
      %s50 = sshll.u32 [#allocation7], 4
      %s51 = int_to_ptr.vmem [resolvable:$true] %s50
      %56 = dma.hbm_to_vmem [thread:$0]  %s5, 256, %s51, [#allocation6], 64, 64, 4
    $region25: #{tpu_custom_call.1} parent=1 // pred_fallthru
      _
    // Predicated region
    $region26: #{tpu_custom_call.1} parent=1 // pred_check
      _
    $region27: #{tpu_custom_call.1} parent=1 // pred_check_branch
      %58 = sbr.rel (0) target = $region29
    $region28: #{tpu_custom_call.1} parent=1 // pred_region
      _
    $region29: #{tpu_custom_call.1} parent=1 // pred_fallthru
      _
    // Predicated region
    $region30: #{tpu_custom_call.1} parent=1 // pred_check
      _
    $region31: #{tpu_custom_call.1} parent=1 // pred_check_branch
      %60 = sbr.rel (0) target = $region33
    $region32: #{tpu_custom_call.1} parent=1 // pred_region
      %61 = dma.done [#allocation3], 128
    $region33: #{tpu_custom_call.1} parent=1 // pred_fallthru
      _
    // Predicated region
    $region34: #{tpu_custom_call.1} parent=1 // pred_check
      _
    $region35: #{tpu_custom_call.1} parent=1 // pred_check_branch
      %63 = sbr.rel (0) target = $region37
    $region36: #{tpu_custom_call.1} parent=1 // pred_region
      %64 = dma.done [#allocation6], 128
    $region37: #{tpu_custom_call.1} parent=1 // pred_fallthru
      _
    // Predicated region
    $region38: #{tpu_custom_call.1} parent=1 // pred_check
      _
    $region39: #{tpu_custom_call.1} parent=1 // pred_check_branch
      %66 = sbr.rel (0) target = $region41
    $region40: #{tpu_custom_call.1} parent=1 // pred_region
      %67 = dma.done [#allocation6], 256
    $region41: #{tpu_custom_call.1} parent=1 // pred_fallthru
      _
    %s69 = smul.u32 0, 16
    %v70 = vld [vmem:[%s1] sm:$0xff]
    %v71 = vld [vmem:[%s1 + $0x8] sm:$0xff]
    %v72 = vpack.c.bf16 %v71, %v70
    %s73 = scalar_lea.vmem %s1, %s69
    %v74 = vld [vmem:[%s73] sm:$0xff]
    %v75 = vld [vmem:[%s73 + $0x8] sm:$0xff]
    %v76 = vpack.c.bf16 %v75, %v74
    %v77 = vld [vmem:[%s0] sm:$0xff]
    %v78 = vld [vmem:[%s0 + $0x8] sm:$0xff]
    %v79 = vlaneseq
    %v80 = vand.u32 %v79, 127
    %81 = vset.pattern.permute.xlu0 0
    %82 = vperm.xlu0 %81, %v77
    %v83 = vpop.permute.xlu0 %82
    %84 = vset.pattern.permute.xlu0 0
    %85 = vperm.xlu0 %84, %v78
    %v86 = vpop.permute.xlu0 %85
    %vm87 = vcmp.eq.s32.totalorder %v80, %v83
    %vm88 = vcmp.eq.s32.totalorder %v80, %v86
    %v89 = vsel %vm87, 1.0, 0.0
    %v90 = vsel %vm88, 1.0, 0.0
    %v91 = vpack.c.bf16 %v90, %v89
    %vm92 = vcmask 130048
    %v94 = vsel %vm92, %v91, 0
    %96 = vmatprep.subr.bf16.mxu0 0
    %97 = vmatpush1.bf16.msra.mxu0 0
    %98 = vmatprep.subr.bf16.mxu0 0
    %99 = vmatpush1.bf16.msra.mxu0 0
    %100 = vmatprep.subr.bf16.mxu0 0
    %101 = vmatpush1.bf16.msra.mxu0 0
    %102 = vmatprep.subr.bf16.mxu0 0
    %103 = vmatpush1.bf16.msra.mxu0 0
    %104 = vmatprep.subr.bf16.mxu0 0
    %105 = vmatpush1.bf16.msra.mxu0 0
    %106 = vmatprep.subr.bf16.mxu0 0
    %107 = vmatpush1.bf16.msra.mxu0 0
    %108 = vmatprep.subr.bf16.mxu0 0
    %109 = vmatpush1.bf16.msra.mxu0 0
    %110 = vmatprep.subr.bf16.mxu0 0
    %111 = vmatpush1.bf16.msra.mxu0 %v72
    %112 = vmatprep.subr.bf16.mxu0 0
    %113 = vmatpush2.bf16.msra.mxu0 0
    %114 = vmatprep.subr.bf16.mxu0 0
    %115 = vmatpush2.bf16.msra.mxu0 0
    %116 = vmatprep.subr.bf16.mxu0 0
    %117 = vmatpush2.bf16.msra.mxu0 0
    %118 = vmatprep.subr.bf16.mxu0 0
    %119 = vmatpush2.bf16.msra.mxu0 0
    %120 = vmatprep.subr.bf16.mxu0 0
    %121 = vmatpush2.bf16.msra.mxu0 0
    %122 = vmatprep.subr.bf16.mxu0 0
    %123 = vmatpush2.bf16.msra.mxu0 0
    %124 = vmatprep.subr.bf16.mxu0 0
    %125 = vmatpush2.bf16.msra.mxu0 0
    %126 = vmatprep.subr.bf16.mxu0 0
    %127 = vmatpush2.bf16.msra.mxu0 0
    %128 = vmatprep.mubr.bf16.mxu0 0
    %129 = vmatmul.mubr.bf16.gmra.mxu0 %v94
    %v130 = vpop.f32.mrf.mxu0
    %v131 = vadd.f32 0.0, %v130
    %v132 = vpop.f32.mrf.mxu0
    %v133 = vpop.f32.mrf.mxu0
    %v134 = vadd.f32 0.0, %v133
    %v135 = vpop.f32.mrf.mxu0
    %136 = vdwg.mxu0
    %v137 = vpack.c.bf16 %v134, %v131
    %v138 = vld [vmem:[#allocation2] sm:$0xf]
    %v139 = vld [vmem:[#allocation2 + $0x4] sm:$0xf]
    %v140 = vld [vmem:[#allocation5] sm:$0xf]
    %v141 = vld [vmem:[#allocation5 + $0x4] sm:$0xf]
    %v144 = vunpack.c.l.b16 %v140
    %v145 = vunpack.c.l.b16 %v141
    %v146 = vpack.c.b16 %v145, %v144
    %v149 = vsel %vm92, %v76, 0
    %151 = vmatprep.subr.bf16.mxu0 0
    %152 = vmatpush1.bf16.msra.mxu0 0
    %153 = vmatprep.subr.bf16.mxu0 0
    %154 = vmatpush1.bf16.msra.mxu0 0
    %155 = vmatprep.subr.bf16.mxu0 0
    %156 = vmatpush1.bf16.msra.mxu0 0
    %157 = vmatprep.subr.bf16.mxu0 0
    %158 = vmatpush1.bf16.msra.mxu0 0
    %159 = vmatprep.subr.bf16.mxu0 0
    %160 = vmatpush1.bf16.msra.mxu0 0
    %161 = vmatprep.subr.bf16.mxu0 0
    %162 = vmatpush1.bf16.msra.mxu0 0
    %163 = vmatprep.subr.bf16.mxu0 0
    %164 = vmatpush1.bf16.msra.mxu0 0
    %165 = vmatprep.subr.bf16.mxu0 0
    %166 = vmatpush1.bf16.msra.mxu0 %v146
    %167 = vmatprep.subr.bf16.mxu0 0
    %168 = vmatpush2.bf16.msra.mxu0 0
    %169 = vmatprep.subr.bf16.mxu0 0
    %170 = vmatpush2.bf16.msra.mxu0 0
    %171 = vmatprep.subr.bf16.mxu0 0
    %172 = vmatpush2.bf16.msra.mxu0 0
    %173 = vmatprep.subr.bf16.mxu0 0
    %174 = vmatpush2.bf16.msra.mxu0 0
    %175 = vmatprep.subr.bf16.mxu0 0
    %176 = vmatpush2.bf16.msra.mxu0 0
    %177 = vmatprep.subr.bf16.mxu0 0
    %178 = vmatpush2.bf16.msra.mxu0 0
    %179 = vmatprep.subr.bf16.mxu0 0
    %180 = vmatpush2.bf16.msra.mxu0 0
    %181 = vmatprep.subr.bf16.mxu0 0
    %182 = vmatpush2.bf16.msra.mxu0 0
    %183 = vmatprep.mubr.bf16.mxu0 0
    %184 = vmatmul.mubr.bf16.gmra.mxu0 %v149
    %v185 = vpop.f32.mrf.mxu0
    %v186 = vadd.f32 0.0, %v185
    %v187 = vpop.f32.mrf.mxu0
    %v188 = vpop.f32.mrf.mxu0
    %v189 = vadd.f32 0.0, %v188
    %v190 = vpop.f32.mrf.mxu0
    %191 = vdwg.mxu0
    %v194 = vunpack.c.l.b16 %v138
    %v195 = vunpack.c.l.b16 %v139
    %v196 = vpack.c.b16 %v195, %v194
    %v199 = vsel %vm92, %v137, 0
    %201 = vmatprep.subr.bf16.mxu0 0
    %202 = vmatpush1.bf16.msra.mxu0 0
    %203 = vmatprep.subr.bf16.mxu0 0
    %204 = vmatpush1.bf16.msra.mxu0 0
    %205 = vmatprep.subr.bf16.mxu0 0
    %206 = vmatpush1.bf16.msra.mxu0 0
    %207 = vmatprep.subr.bf16.mxu0 0
    %208 = vmatpush1.bf16.msra.mxu0 0
    %209 = vmatprep.subr.bf16.mxu0 0
    %210 = vmatpush1.bf16.msra.mxu0 0
    %211 = vmatprep.subr.bf16.mxu0 0
    %212 = vmatpush1.bf16.msra.mxu0 0
    %213 = vmatprep.subr.bf16.mxu0 0
    %214 = vmatpush1.bf16.msra.mxu0 0
    %215 = vmatprep.subr.bf16.mxu0 0
    %216 = vmatpush1.bf16.msra.mxu0 %v196
    %217 = vmatprep.subr.bf16.mxu0 0
    %218 = vmatpush2.bf16.msra.mxu0 0
    %219 = vmatprep.subr.bf16.mxu0 0
    %220 = vmatpush2.bf16.msra.mxu0 0
    %221 = vmatprep.subr.bf16.mxu0 0
    %222 = vmatpush2.bf16.msra.mxu0 0
    %223 = vmatprep.subr.bf16.mxu0 0
    %224 = vmatpush2.bf16.msra.mxu0 0
    %225 = vmatprep.subr.bf16.mxu0 0
    %226 = vmatpush2.bf16.msra.mxu0 0
    %227 = vmatprep.subr.bf16.mxu0 0
    %228 = vmatpush2.bf16.msra.mxu0 0
    %229 = vmatprep.subr.bf16.mxu0 0
    %230 = vmatpush2.bf16.msra.mxu0 0
    %231 = vmatprep.subr.bf16.mxu0 0
    %232 = vmatpush2.bf16.msra.mxu0 0
    %233 = vmatprep.mubr.bf16.mxu0 0
    %234 = vmatmul.mubr.bf16.gmra.mxu0 %v199
    %v235 = vpop.f32.mrf.mxu0
    %v236 = vadd.f32 %v186, %v235
    %v237 = vpop.f32.mrf.mxu0
    %v238 = vpop.f32.mrf.mxu0
    %v239 = vadd.f32 %v189, %v238
    %v240 = vpop.f32.mrf.mxu0
    %241 = vdwg.mxu0
    %v242 = vld [vmem:[%s4] sm:$0x1]
    %v244 = vlaneseq
    %v245 = vshrl.u32 %v244, 7
    %v246 = vsub.s32 0, %v245
    %v247 = vrot.slane %v242, %v246
    %v249 = vadd.f32 %v236, %v247
    %v250 = vadd.f32 %v239, %v247
    %v251 = vmax.f32 %v249, 0.0
    %v252 = vmax.f32 %v250, 0.0
    %v253 = vpack.c.bf16 %v252, %v251
    %v254 = vld [vmem:[#allocation7] sm:$0xf]
    %v255 = vld [vmem:[#allocation7 + $0x4] sm:$0xf]
    %v256 = vld [vmem:[#allocation7 + $0x8] sm:$0xf]
    %v257 = vld [vmem:[#allocation7 + $0xc] sm:$0xf]
    %v258 = vld [vmem:[%s6] sm:$0x1]
    %v260 = vlaneseq
    %v261 = vshrl.u32 %v260, 7
    %v262 = vsub.s32 0, %v261
    %v263 = vrot.slane %v258, %v262
    %v269 = vunpack.c.l.b16 %v254
    %v270 = vunpack.c.l.b16 %v255
    %v271 = vunpack.c.l.b16 %v256
    %v272 = vunpack.c.l.b16 %v257
    %v273 = vpack.c.b16 %v270, %v269
    %v274 = vpack.c.b16 %v272, %v271
    %vm277 = vcmask 261120
    %v279 = vsel %vm277, %v253, 0
    %281 = vmatprep.subr.bf16.mxu0 0
    %282 = vmatpush1.bf16.msra.mxu0 0
    %283 = vmatprep.subr.bf16.mxu0 0
    %284 = vmatpush1.bf16.msra.mxu0 0
    %285 = vmatprep.subr.bf16.mxu0 0
    %286 = vmatpush1.bf16.msra.mxu0 0
    %287 = vmatprep.subr.bf16.mxu0 0
    %288 = vmatpush1.bf16.msra.mxu0 0
    %289 = vmatprep.subr.bf16.mxu0 0
    %290 = vmatpush1.bf16.msra.mxu0 0
    %291 = vmatprep.subr.bf16.mxu0 0
    %292 = vmatpush1.bf16.msra.mxu0 0
    %293 = vmatprep.subr.bf16.mxu0 0
    %294 = vmatpush1.bf16.msra.mxu0 %v274
    %295 = vmatprep.subr.bf16.mxu0 0
    %296 = vmatpush1.bf16.msra.mxu0 %v273
    %297 = vmatprep.subr.bf16.mxu0 0
    %298 = vmatpush2.bf16.msra.mxu0 0
    %299 = vmatprep.subr.bf16.mxu0 0
    %300 = vmatpush2.bf16.msra.mxu0 0
    %301 = vmatprep.subr.bf16.mxu0 0
    %302 = vmatpush2.bf16.msra.mxu0 0
    %303 = vmatprep.subr.bf16.mxu0 0
    %304 = vmatpush2.bf16.msra.mxu0 0
    %305 = vmatprep.subr.bf16.mxu0 0
    %306 = vmatpush2.bf16.msra.mxu0 0
    %307 = vmatprep.subr.bf16.mxu0 0
    %308 = vmatpush2.bf16.msra.mxu0 0
    %309 = vmatprep.subr.bf16.mxu0 0
    %310 = vmatpush2.bf16.msra.mxu0 0
    %311 = vmatprep.subr.bf16.mxu0 0
    %312 = vmatpush2.bf16.msra.mxu0 0
    %313 = vmatprep.mubr.bf16.mxu0 0
    %314 = vmatmul.mubr.bf16.gmra.mxu0 %v279
    %v315 = vpop.f32.mrf.mxu0
    %v316 = vadd.f32 %v263, %v315
    %v317 = vpop.f32.mrf.mxu0
    %v318 = vpop.f32.mrf.mxu0
    %v319 = vadd.f32 %v263, %v318
    %v320 = vpop.f32.mrf.mxu0
    %321 = vdwg.mxu0
    %322 = vmax.xlane.f32.xlu0 %v316
    %v323 = vpop.xlane.xlu0 %322
    %324 = vmax.xlane.f32.xlu0 %v319
    %v325 = vpop.xlane.xlu0 %324
    %v326 = vsub.f32 %v316, %v323
    %v327 = vsub.f32 %v319, %v325
    %v328 = vmul.f32 %v326, 1.442695
    %v329 = vpow.pop %v328
    %v330 = vmul.f32 %v327, 1.442695
    %v331 = vpow.pop %v330
    %332 = vadd.xlane.f32.xlu0 %v329
    %v333 = vpop.xlane.xlu0 %332
    %334 = vadd.xlane.f32.xlu0 %v331
    %v335 = vpop.xlane.xlu0 %334
    %v336 = vrcp.pop %v333
    %v337 = vrcp.pop %v335
    %v338 = vmul.f32 %v329, %v336
    %v339 = vmul.f32 %v331, %v337
    %v340 = vpack.c.bf16 %v339, %v338
    %v342 = vunpack.c.l.b16 %v340
    %v343 = vunpack.c.h.b16 %v340
    %v344 = vpack.c.b16 %v342, %v342
    %v345 = vpack.c.b16 %v343, %v343
    %348 = vst [vmem:[#allocation8] sm:$0xf] %v344
    %349 = vst [vmem:[#allocation8 + $0x4] sm:$0xf] %v345
    // Predicated region
    $region42: #{tpu_custom_call.1} parent=1 // pred_check
      _
    $region43: #{tpu_custom_call.1} parent=1 // pred_check_branch
      %351 = sbr.rel (0) target = $region45
    $region44: #{tpu_custom_call.1} parent=1 // pred_region
      %s353 = ssub.s32 128, 128
      %354 = vsyncadd [#allocation4], %s353
      %s355 = sshll.u32 [#allocation8], 4
      %s356 = int_to_ptr.vmem [resolvable:$true] %s355
      %361 = dma.vmem_to_hbm [thread:$0]  %s356, 128, %s7, [#allocation4], 64, 64, 4
    $region45: #{tpu_custom_call.1} parent=1 // pred_fallthru
      _
    // Predicated region
    $region46: #{tpu_custom_call.1} parent=1 // pred_check
      _
    $region47: #{tpu_custom_call.1} parent=1 // pred_check_branch
      %363 = sbr.rel (0) target = $region49
    $region48: #{tpu_custom_call.1} parent=1 // pred_region
      %364 = dma.done [#allocation4], 128
    $region49: #{tpu_custom_call.1} parent=1 // pred_fallthru
      _
    %365 = vsyncpa [#allocation3], 1
    %366 = vsyncpa [#allocation6], 1
    %367 = vsyncpa [#allocation4], 1

</llo_original>
